<compile_context>
chip_gen: v7x
topology: tpu7x:2x2x1
jax: 0.10.0
libtpu: 0.0.40
codegen_flags: <defaults>
</compile_context>

<pallas_src>
import functools
import math

import jax
import jax.numpy as jnp
from jax.experimental import pallas as pl
from jax.experimental.pallas import tpu as pltpu


# ---------------------------------------------------------------------------
# Dispatch thresholds (bytes).
_JAX_FASTPATH_BYTES = 64 << 10   # below this, plain img[perm] (fusible by XLA)
_VMEM_PLANE_BYTES = 64 << 10     # staged path only when per-channel planes are small
_VMEM_TOTAL_BYTES = 6 << 20      # conservative for v7x (64 MiB VMEM, double buffers)


# ---------------------------------------------------------------------------
# VMEM-staged path: whole (C, M) tensor lives in VMEM, shuffle in place.
def _vmem_shuffle_kernel(perm_ref, x_ref, o_ref):
    C = o_ref.shape[0]
    if C <= 32:
        # Fully static: straight-line code for the LLO scheduler.
        for c in range(C):
            o_ref[c] = x_ref[perm_ref[c]]
    else:
        @pl.loop(0, C)
        def _(c):
            o_ref[c] = x_ref[perm_ref[c]]


# ---------------------------------------------------------------------------
# HBM->HBM DMA path: out[c, j*chunk : (j+1)*chunk] <- in[perm[c], same slice].
def _dma_shuffle_kernel(perm_ref, x_hbm, o_hbm, sem, *, splits, chunk, inflight):
    C = o_hbm.shape[0]
    N = C * splits                 # total number of chunk copies
    K = min(inflight, N)           # semaphore ring depth
    k_pow2 = (K & (K - 1)) == 0
    log2s = splits.bit_length() - 1  # splits is a power of two

    def start_chunk_copy(c, j, src, slot):
        lo = j * chunk
        pltpu.make_async_copy(
            x_hbm.at[src, pl.ds(lo, chunk)],
            o_hbm.at[c, pl.ds(lo, chunk)],
            sem.at[slot],
        ).start()

    def wait_slot(slot):
        # Every copy has the identical (chunk,) shape, so this size proxy
        # matches whatever copy is actually in flight on this slot.
        pltpu.make_async_copy(
            x_hbm.at[0, pl.ds(0, chunk)],
            o_hbm.at[0, pl.ds(0, chunk)],
            sem.at[slot],
        ).wait()

    # Prime: first K copies, fully static (K <= 32).
    for i in range(K):
        c, j = divmod(i, splits)
        start_chunk_copy(c, j, perm_ref[c], i)

    # Steady state (zero-trip when N <= K): retire the oldest copy on a slot,
    # then reuse that slot for the next chunk.
    @pl.loop(K, N)
    def _(i):
        if splits == 1:
            c, j = i, 0
        else:
            c = i >> log2s
            j = i & (splits - 1)
        src = perm_ref[c]                       # SMEM read hoisted above the wait
        slot = (i & (K - 1)) if k_pow2 else (i % K)
        wait_slot(slot)
        start_chunk_copy(c, j, src, slot)

    # Drain: exactly one outstanding copy per slot.
    for slot in range(K):
        wait_slot(slot)


# ---------------------------------------------------------------------------
def _pick_splits(C, M, itemsize, inflight):
    """Largest power-of-two splits of the flattened plane M such that
    chunks stay >=256 KiB, and we only keep splitting while we still need more
    in-flight descriptors (C*splits < inflight) or chunks are still > 4 MiB."""
    plane_bytes = M * itemsize
    min_chunk_bytes = 256 << 10
    max_chunk_bytes = 4 << 20
    splits = 1
    while True:
        nxt = splits * 2
        if nxt > M or M % nxt != 0:
            break
        if plane_bytes // nxt < min_chunk_bytes:
            break
        need_more_descriptors = C * splits < inflight
        chunk_too_big = plane_bytes // splits > max_chunk_bytes
        if not (need_more_descriptors or chunk_too_big):
            break
        splits = nxt
    return splits


def channel_shuffle(img: jax.Array, perm: jax.Array, *, inflight: int = 16,
                    path: str = "auto") -> jax.Array:
    """Permute axis 0 of `img` (CHW or any ndim>=2) according to `perm` (int[C])."""
    if img.ndim < 2:
        return img[perm]

    C = img.shape[0]
    M = math.prod(img.shape[1:])
    itemsize = jnp.dtype(img.dtype).itemsize
    plane_bytes = M * itemsize
    total_bytes = C * plane_bytes
    perm = perm.astype(jnp.int32)

    if path == "auto":
        if total_bytes <= _JAX_FASTPATH_BYTES:
            path = "jax"
        elif plane_bytes <= _VMEM_PLANE_BYTES and total_bytes <= _VMEM_TOTAL_BYTES:
            path = "vmem"
        else:
            path = "dma"

    if path == "jax":
        return img[perm]

    x2 = img.reshape(C, M)
    cost = pl.CostEstimate(flops=0, transcendentals=0, bytes_accessed=2 * total_bytes)

    if path == "vmem":
        out2 = pl.pallas_call(
            _vmem_shuffle_kernel,
            out_shape=jax.ShapeDtypeStruct((C, M), img.dtype),
            grid_spec=pltpu.PrefetchScalarGridSpec(
                num_scalar_prefetch=1,
                grid=(1,),
                in_specs=[pl.BlockSpec((C, M), lambda i, perm_ref: (0, 0))],
                out_specs=pl.BlockSpec((C, M), lambda i, perm_ref: (0, 0)),
            ),
            compiler_params=pltpu.CompilerParams(
                dimension_semantics=("arbitrary",),
                vmem_limit_bytes=48 << 20,
            ),
            cost_estimate=cost,
        )(perm, x2)
        return out2.reshape(img.shape)

    # --- DMA path ---
    inflight = max(1, int(inflight))
    if inflight & (inflight - 1):                      # round down to power of two
        inflight = 1 << (inflight.bit_length() - 1)
    splits = _pick_splits(C, M, itemsize, inflight)
    chunk = M // splits
    n_copies = C * splits
    k = min(inflight, n_copies)

    out2 = pl.pallas_call(
        functools.partial(_dma_shuffle_kernel, splits=splits, chunk=chunk,
                          inflight=inflight),
        out_shape=jax.ShapeDtypeStruct((C, M), img.dtype),
        grid_spec=pltpu.PrefetchScalarGridSpec(
            num_scalar_prefetch=1,
            grid=(1,),
            in_specs=[pl.BlockSpec(memory_space=pl.ANY)],   # raw HBM ref
            out_specs=pl.BlockSpec(memory_space=pl.ANY),    # raw HBM ref, DMA-written
            scratch_shapes=[pltpu.SemaphoreType.DMA((k,))],
        ),
        compiler_params=pltpu.CompilerParams(dimension_semantics=("arbitrary",)),
        cost_estimate=cost,
    )(perm, x2)
    return out2.reshape(img.shape)


def channel_shuffle_random(img: jax.Array, key: jax.Array, **kw) -> jax.Array:
    """Full ChannelShuffle.forward semantics: random channel order + gather."""
    perm = jax.random.permutation(key, img.shape[0]).astype(jnp.int32)
    return channel_shuffle(img, perm, **kw)


# ---------------------------------------------------------------------------
if __name__ == "__main__":
    key = jax.random.PRNGKey(0)
    k_img, k_perm = jax.random.split(key)

    # Small CHW image consistent with the module (single image, channels first).
    C, H, W = 4, 16, 16
    img = jax.random.normal(k_img, (C, H, W), dtype=jnp.float32)
    # Deterministic random channel order (== torch.rand(C).argsort() semantics).
    perm = jax.random.permutation(k_perm, C).astype(jnp.int32)
    ref = img[perm]

    # 1) VMEM-staged Pallas path (small planes, e.g. shuffle-net style).
    out_vmem = jax.block_until_ready(channel_shuffle(img, perm, path="vmem"))
    assert out_vmem.shape == img.shape and out_vmem.dtype == img.dtype
    assert jnp.array_equal(out_vmem, ref), "vmem path mismatch vs reference gather"

    # 2) DMA HBM->HBM path (doctr-style low C, larger planes).
    C2, H2, W2 = 3, 64, 128
    img2 = jax.random.normal(k_img, (C2, H2, W2), dtype=jnp.float32)
    perm2 = jax.random.permutation(k_perm, C2).astype(jnp.int32)
    out_dma = jax.block_until_ready(channel_shuffle(img2, perm2, path="dma"))
    assert jnp.array_equal(out_dma, img2[perm2]), "dma path mismatch vs reference gather"

    # 3) Auto dispatch (tiny image -> fusible plain-JAX gather fast path).
    out_auto = jax.block_until_ready(channel_shuffle(img, perm))
    assert jnp.array_equal(out_auto, ref), "auto path mismatch vs reference gather"

    print("KERNEL_OK")
</pallas_src>

<mosaic_0001>
module attributes {stable_mosaic.version = 11 : i64} {
  func.func @_vmem_shuffle_kernel(%arg0: i32, %arg1: memref<4xi32, #tpu.memory_space<smem>>, %arg2: memref<4x256xf32, #tpu.memory_space<vmem>>, %arg3: memref<4x256xf32, #tpu.memory_space<vmem>>) attributes {dimension_semantics = [#tpu.dimension_semantics<arbitrary>], iteration_bounds = array<i64: 1>, scalar_prefetch = 1 : i64, scratch_operands = 0 : i64, tpu.core_type = #tpu.core_type<tc>, window_params = [{pipeline_mode = #tpu.pipeline_mode<synchronous>, transform_indices = @transform_0, window_bounds = array<i64: 4, 256>}, {pipeline_mode = #tpu.pipeline_mode<synchronous>, transform_indices = @transform_1, window_bounds = array<i64: 4, 256>}]} {
    %c0 = arith.constant 0 : index
    %0 = memref.load %arg1[%c0] : memref<4xi32, #tpu.memory_space<smem>>
    %1 = arith.index_cast %0 : i32 to index
    %c0_0 = arith.constant 0 : index
    %2 = vector.load %arg2[%1, %c0_0] : memref<4x256xf32, #tpu.memory_space<vmem>>, vector<1x256xf32>
    %3 = vector.shape_cast %2 : vector<1x256xf32> to vector<256xf32>
    %c0_1 = arith.constant 0 : index
    %c0_2 = arith.constant 0 : index
    %4 = vector.load %arg3[%c0_1, %c0_2] : memref<4x256xf32, #tpu.memory_space<vmem>>, vector<1x256xf32>
    %5 = vector.shape_cast %4 : vector<1x256xf32> to vector<256xf32>
    %6 = vector.shape_cast %3 : vector<256xf32> to vector<1x256xf32>
    tpu.vector_store %arg3[%c0_1, %c0_2], %6 {strides = array<i32>} : memref<4x256xf32, #tpu.memory_space<vmem>>, vector<1x256xf32>,
    %c1 = arith.constant 1 : index
    %7 = memref.load %arg1[%c1] : memref<4xi32, #tpu.memory_space<smem>>
    %8 = arith.index_cast %7 : i32 to index
    %c0_3 = arith.constant 0 : index
    %9 = vector.load %arg2[%8, %c0_3] : memref<4x256xf32, #tpu.memory_space<vmem>>, vector<1x256xf32>
    %10 = vector.shape_cast %9 : vector<1x256xf32> to vector<256xf32>
    %c1_4 = arith.constant 1 : index
    %c0_5 = arith.constant 0 : index
    %11 = vector.load %arg3[%c1_4, %c0_5] : memref<4x256xf32, #tpu.memory_space<vmem>>, vector<1x256xf32>
    %12 = vector.shape_cast %11 : vector<1x256xf32> to vector<256xf32>
    %13 = vector.shape_cast %10 : vector<256xf32> to vector<1x256xf32>
    tpu.vector_store %arg3[%c1_4, %c0_5], %13 {strides = array<i32>} : memref<4x256xf32, #tpu.memory_space<vmem>>, vector<1x256xf32>,
    %c2 = arith.constant 2 : index
    %14 = memref.load %arg1[%c2] : memref<4xi32, #tpu.memory_space<smem>>
    %15 = arith.index_cast %14 : i32 to index
    %c0_6 = arith.constant 0 : index
    %16 = vector.load %arg2[%15, %c0_6] : memref<4x256xf32, #tpu.memory_space<vmem>>, vector<1x256xf32>
    %17 = vector.shape_cast %16 : vector<1x256xf32> to vector<256xf32>
    %c2_7 = arith.constant 2 : index
    %c0_8 = arith.constant 0 : index
    %18 = vector.load %arg3[%c2_7, %c0_8] : memref<4x256xf32, #tpu.memory_space<vmem>>, vector<1x256xf32>
    %19 = vector.shape_cast %18 : vector<1x256xf32> to vector<256xf32>
    %20 = vector.shape_cast %17 : vector<256xf32> to vector<1x256xf32>
    tpu.vector_store %arg3[%c2_7, %c0_8], %20 {strides = array<i32>} : memref<4x256xf32, #tpu.memory_space<vmem>>, vector<1x256xf32>,
    %c3 = arith.constant 3 : index
    %21 = memref.load %arg1[%c3] : memref<4xi32, #tpu.memory_space<smem>>
    %22 = arith.index_cast %21 : i32 to index
    %c0_9 = arith.constant 0 : index
    %23 = vector.load %arg2[%22, %c0_9] : memref<4x256xf32, #tpu.memory_space<vmem>>, vector<1x256xf32>
    %24 = vector.shape_cast %23 : vector<1x256xf32> to vector<256xf32>
    %c3_10 = arith.constant 3 : index
    %c0_11 = arith.constant 0 : index
    %25 = vector.load %arg3[%c3_10, %c0_11] : memref<4x256xf32, #tpu.memory_space<vmem>>, vector<1x256xf32>
    %26 = vector.shape_cast %25 : vector<1x256xf32> to vector<256xf32>
    %27 = vector.shape_cast %24 : vector<256xf32> to vector<1x256xf32>
    tpu.vector_store %arg3[%c3_10, %c0_11], %27 {strides = array<i32>} : memref<4x256xf32, #tpu.memory_space<vmem>>, vector<1x256xf32>,
    return
  }
  func.func @transform_0(%arg0: i32, %arg1: memref<4xi32, #tpu.memory_space<smem>>) -> (i32, i32) {
    %c0_i32 = arith.constant 0 : i32
    %c0_i32_0 = arith.constant 0 : i32
    %c0_i32_1 = arith.constant 0 : i32
    return %c0_i32, %c0_i32_0 : i32, i32
  }
  func.func @transform_1(%arg0: i32, %arg1: memref<4xi32, #tpu.memory_space<smem>>) -> (i32, i32) {
    %c0_i32 = arith.constant 0 : i32
    %c0_i32_0 = arith.constant 0 : i32
    %c0_i32_1 = arith.constant 0 : i32
    return %c0_i32, %c0_i32_0 : i32, i32
  }
}

</mosaic_0001>

<llo_original>
// kernel: tpu_custom_call.1
$region0: #{tpu_custom_call.1}
  #allocation0 [shape = 'u32[]', space=smem, size = 0x4, offset = 0x4, fixed_abs, tag = 'smem constant byte address 0x4 - core index']
  #allocation1 [shape = 'u32[144,128]{1,0:T(1,128)}', space=vmem, size = 0x12000, scoped, tag = 'internal scratch']
  #allocation2 [shape = 's32[1]{0}', space=sflag, size = 0x4, scoped, tag = 'scoped memory for tpu_custom_call.1']
  #allocation3 [shape = 'u8[512]{0}', space=smem, size = 0x200, scoped, tag = 'prefetched SMEM operand 0']
  %s0 = inlined_call_operand.hbm [shape: s32[4], index: 0, kind: input, shape index: {}]
  %s1 = inlined_call_operand.hbm [shape: f32[4,256], index: 1, kind: input, shape index: {}]
  %s2 = inlined_call_operand.hbm [shape: f32[4,256], index: 2, kind: output, shape index: {}]
  %s3 = sld [smem:[#allocation0]]
  $region18: #{tpu_custom_call.1} parent=0
    _
  %s5 = ssub.s32 1, %s3
  %s6 = scalar_select 0, %s5, %s3
  %8 = dma.hbm_to_smem %s0, 16, [#allocation3], [#allocation2]
  %9 = dma.done [#allocation2], 16
  %10 = sfence
  $region1: #{tpu_custom_call.1} parent=0
    #allocation4 [shape = 'u8[4096]{0}', space=vmem, size = 0x1000, scoped, tag = 'input window, operand 1, single buffered']
    #allocation5 [shape = 's32[1]{0}', space=sflag, size = 0x4, scoped, tag = 'scoped memory for tpu_custom_call.1']
    #allocation6 [shape = 's32[1]{0}', space=sflag, size = 0x4, scoped, tag = 'scoped memory for tpu_custom_call.1']
    #allocation7 [shape = 'u8[4096]{0}', space=vmem, size = 0x1000, scoped, tag = 'output window, operand 0, single buffered']
    %11 = vsyncpa [#allocation5], 0
    %12 = vsyncpa [#allocation6], 0
    // Predicated region
    $region2: #{tpu_custom_call.1} parent=1 // pred_check
      _
    $region3: #{tpu_custom_call.1} parent=1 // pred_check_branch
      %14 = sbr.rel (0) target = $region5
    $region4: #{tpu_custom_call.1} parent=1 // pred_region
      %s16 = ssub.s32 128, 128
      %17 = vsyncadd [#allocation5], %s16
      %s19 = sshll.u32 [#allocation4], 4
      %s20 = int_to_ptr.vmem [resolvable:$true] %s19
      %22 = dma.hbm_to_vmem [thread:$0]  %s1, 128, %s20, [#allocation5]
    $region5: #{tpu_custom_call.1} parent=1 // pred_fallthru
      _
    // Predicated region
    $region6: #{tpu_custom_call.1} parent=1 // pred_check
      _
    $region7: #{tpu_custom_call.1} parent=1 // pred_check_branch
      %24 = sbr.rel (0) target = $region9
    $region8: #{tpu_custom_call.1} parent=1 // pred_region
      %25 = dma.done [#allocation5], 128
    $region9: #{tpu_custom_call.1} parent=1 // pred_fallthru
      _
    %s26 = sld [smem:[#allocation3]]
    %s27 = sshra.s32 %s26, 2
    %s28 = sand.u32 %s26, 3
    %s29 = sshra.s32 %s26, 2
    %s30 = sand.u32 %s26, 3
    %s31 = smul.u32 %s27, 2
    %s32 = smul.u32 %s31, 4
    %s33 = sadd.s32 %s32, %s30
    %s34 = scalar_lea.vmem [#allocation4], %s33
    %v35 = vld [vmem:[%s34] ss:$4 sm:$0x3]
    %v36 = vlaneseq
    %vm37 = vcmp.ge.s32.totalorder %v36, 0
    %vm38 = vcmp.lt.s32.totalorder %v36, 256
    %vm39 = vmand %vm37, %vm38
    %40 = vst.msk [vmem:[#allocation7] ss:$4 sm:$0x3] %vm39, %v35
    %s41 = sld [smem:[#allocation3 + $0x1]]
    %s42 = sshra.s32 %s41, 2
    %s43 = sand.u32 %s41, 3
    %s44 = sshra.s32 %s41, 2
    %s45 = sand.u32 %s41, 3
    %s46 = smul.u32 %s42, 2
    %s47 = smul.u32 %s46, 4
    %s48 = sadd.s32 %s47, %s45
    %s49 = scalar_lea.vmem [#allocation4], %s48
    %v50 = vld [vmem:[%s49] ss:$4 sm:$0x3]
    %s51 = scalar_lea.vmem [#allocation7], 1
    %52 = vst.msk [vmem:[%s51] ss:$4 sm:$0x3] %vm39, %v50
    %s53 = sld [smem:[#allocation3 + $0x2]]
    %s54 = sshra.s32 %s53, 2
    %s55 = sand.u32 %s53, 3
    %s56 = sshra.s32 %s53, 2
    %s57 = sand.u32 %s53, 3
    %s58 = smul.u32 %s54, 2
    %s59 = smul.u32 %s58, 4
    %s60 = sadd.s32 %s59, %s57
    %s61 = scalar_lea.vmem [#allocation4], %s60
    %v62 = vld [vmem:[%s61] ss:$4 sm:$0x3]
    %s63 = scalar_lea.vmem [#allocation7], 2
    %64 = vst.msk [vmem:[%s63] ss:$4 sm:$0x3] %vm39, %v62
    %s65 = sld [smem:[#allocation3 + $0x3]]
    %s66 = sshra.s32 %s65, 2
    %s67 = sand.u32 %s65, 3
    %s68 = sshra.s32 %s65, 2
    %s69 = sand.u32 %s65, 3
    %s70 = smul.u32 %s66, 2
    %s71 = smul.u32 %s70, 4
    %s72 = sadd.s32 %s71, %s69
    %s73 = scalar_lea.vmem [#allocation4], %s72
    %v74 = vld [vmem:[%s73] ss:$4 sm:$0x3]
    %s75 = scalar_lea.vmem [#allocation7], 3
    %76 = vst.msk [vmem:[%s75] ss:$4 sm:$0x3] %vm39, %v74
    // Predicated region
    $region10: #{tpu_custom_call.1} parent=1 // pred_check
      _
    $region11: #{tpu_custom_call.1} parent=1 // pred_check_branch
      %78 = sbr.rel (0) target = $region13
    $region12: #{tpu_custom_call.1} parent=1 // pred_region
      %s80 = ssub.s32 128, 128
      %81 = vsyncadd [#allocation6], %s80
      %s83 = sshll.u32 [#allocation7], 4
      %s84 = int_to_ptr.vmem [resolvable:$true] %s83
      %86 = dma.vmem_to_hbm [thread:$0]  %s84, 128, %s2, [#allocation6]
    $region13: #{tpu_custom_call.1} parent=1 // pred_fallthru
      _
    // Predicated region
    $region14: #{tpu_custom_call.1} parent=1 // pred_check
      _
    $region15: #{tpu_custom_call.1} parent=1 // pred_check_branch
      %88 = sbr.rel (0) target = $region17
    $region16: #{tpu_custom_call.1} parent=1 // pred_region
      %89 = dma.done [#allocation6], 128
    $region17: #{tpu_custom_call.1} parent=1 // pred_fallthru
      _
    %90 = vsyncpa [#allocation5], 1
    %91 = vsyncpa [#allocation6], 1

</llo_original>
